<compile_context>
chip_gen: v5e
topology: v5e:2x2
jax: 0.10.0
libtpu: 0.0.40
codegen_flags: <defaults>
</compile_context>

<pallas_src>
import math
import functools

import jax
import jax.numpy as jnp
from jax.experimental import pallas as pl
from jax.experimental.pallas import tpu as pltpu


def mab_kernel(q_ref, k_ref, wq_ref, bq_ref, wkv_ref, bkv_ref, wo_ref, bo_ref,
               o_ref, *, dim_V, num_heads, n_keys):
    f32 = jnp.float32
    bB, Nq, dim_Q = q_ref.shape          # Nq/Nk here are padded (multiple of 8)
    _, Nk, dim_K = k_ref.shape
    dv = dim_V // num_heads
    scale = 1.0 / math.sqrt(dim_V)       # note: sqrt(dim_V), not sqrt(dv)

    # Fold the batch block into the matmul row axis (layout no-op: padded
    # sequence dims are multiples of the 8-row sublane tile).
    q2 = q_ref[...].reshape(bB * Nq, dim_Q).astype(f32)
    k2 = k_ref[...].reshape(bB * Nk, dim_K).astype(f32)

    # Projections: Q, and fused K|V (one (dim_K, 2*dim_V) matmul).
    Qp = jnp.dot(q2, wq_ref[...], preferred_element_type=f32) + bq_ref[...]
    KV = jnp.dot(k2, wkv_ref[...], preferred_element_type=f32) + bkv_ref[...]

    Qp = Qp.reshape(bB, Nq, dim_V)
    KV = KV.reshape(bB, Nk, 2 * dim_V)
    Kp = KV[:, :, :dim_V]
    Vp = KV[:, :, dim_V:]

    # Static additive mask for padded key rows (only built if padding exists).
    if Nk != n_keys:
        key_ids = jax.lax.broadcasted_iota(jnp.int32, (1, 1, Nk), 2)
        key_bias = jnp.where(key_ids < n_keys,
                             jnp.float32(0.0), jnp.float32(-1e30))
    else:
        key_bias = None

    head_outs = []
    for h in range(num_heads):           # static unrolled loop over heads
        lo = h * dv
        Qh = Qp[:, :, lo:lo + dv]        # (bB, Nq, dv)
        Kh = Kp[:, :, lo:lo + dv]        # (bB, Nk, dv)
        Vh = Vp[:, :, lo:lo + dv]        # (bB, Nk, dv)

        # Scale the (smaller) Q head slice instead of the (Nq, Nk) scores.
        S = jnp.einsum('bqd,bkd->bqk', Qh * scale, Kh,
                       preferred_element_type=f32)
        if key_bias is not None:
            S = S + key_bias
        S = S - jnp.max(S, axis=-1, keepdims=True)
        P = jnp.exp(S)
        A = P * pl.reciprocal(jnp.sum(P, axis=-1, keepdims=True), approx=True)

        head_outs.append(Qh + jnp.einsum('bqk,bkd->bqd', A, Vh,
                                         preferred_element_type=f32))

    O = jnp.concatenate(head_outs, axis=-1)      # (bB, Nq, dim_V)

    # O = O + relu(fc_o(O)), again with batch folded into rows.
    O2 = O.reshape(bB * Nq, dim_V)
    FF = jnp.dot(O2, wo_ref[...], preferred_element_type=f32) + bo_ref[...]
    O2 = O2 + jnp.maximum(FF, 0.0)

    o_ref[...] = O2.reshape(bB, Nq, dim_V).astype(o_ref.dtype)


def mab_forward(Q, K, params, *, dim_V, num_heads, block_b=None):
    B, Nq, dim_Q = Q.shape
    _, Nk, dim_K = K.shape
    assert dim_V % num_heads == 0
    wq, bq, wk, bk, wv, bv, wo, bo = params

    # Fuse K/V projection weights (wrapper-side layout plumbing, runs in XLA).
    wkv = jnp.concatenate([wk, wv], axis=1)       # (dim_K, 2*dim_V)
    bkv = jnp.concatenate([bk, bv], axis=1)       # (1, 2*dim_V)

    # Pad sequence dims up to sublane (8) multiples so every in-kernel reshape
    # is a layout no-op; padded keys are masked inside the kernel.
    def rup(x, m):
        return (x + m - 1) // m * m
    Nq_p, Nk_p = rup(Nq, 8), rup(Nk, 8)
    Q_in = jnp.pad(Q, ((0, 0), (0, Nq_p - Nq), (0, 0))) if Nq_p != Nq else Q
    K_in = jnp.pad(K, ((0, 0), (0, Nk_p - Nk), (0, 0))) if Nk_p != Nk else K

    # Batch-block size: biggest divisor of B up to 8.  At toy sizes the whole
    # batch goes in one grid step; large B still yields multiple "parallel"
    # steps for megacore sharding.
    if block_b is None:
        block_b = max(d for d in range(1, min(B, 8) + 1) if B % d == 0)
    grid = (B // block_b,)

    kernel = functools.partial(mab_kernel, dim_V=dim_V, num_heads=num_heads,
                               n_keys=Nk)

    def full(shape):
        # Constant block index -> weights stay resident in VMEM across steps.
        return pl.BlockSpec(shape, lambda b: (0,) * len(shape))

    out = pl.pallas_call(
        kernel,
        out_shape=jax.ShapeDtypeStruct((B, Nq_p, dim_V), Q.dtype),
        grid=grid,
        in_specs=[
            pl.BlockSpec((block_b, Nq_p, dim_Q), lambda b: (b, 0, 0)),
            pl.BlockSpec((block_b, Nk_p, dim_K), lambda b: (b, 0, 0)),
            full((dim_Q, dim_V)), full((1, dim_V)),
            full((dim_K, 2 * dim_V)), full((1, 2 * dim_V)),
            full((dim_V, dim_V)), full((1, dim_V)),
        ],
        out_specs=pl.BlockSpec((block_b, Nq_p, dim_V), lambda b: (b, 0, 0)),
        compiler_params=pltpu.CompilerParams(
            dimension_semantics=("parallel",),
            vmem_limit_bytes=32 * 1024 * 1024),   # raise v5e's 16 MiB default
    )(Q_in, K_in, wq, bq, wkv, bkv, wo, bo)

    return out[:, :Nq, :] if Nq_p != Nq else out


def mab_reference(Q, K, params, *, dim_V, num_heads):
    """Pure-JAX reference mirroring the PyTorch forward exactly."""
    wq, bq, wk, bk, wv, bv, wo, bo = params
    Qp = Q @ wq + bq[0]
    Kp = K @ wk + bk[0]
    Vp = K @ wv + bv[0]
    B = Q.shape[0]
    dv = dim_V // num_heads

    def split_heads(X):      # torch.cat(X.split(dv, 2), 0)
        return jnp.concatenate(
            [X[:, :, h * dv:(h + 1) * dv] for h in range(num_heads)], axis=0)

    Q_ = split_heads(Qp)
    K_ = split_heads(Kp)
    V_ = split_heads(Vp)
    A = jax.nn.softmax(jnp.einsum("bqd,bkd->bqk", Q_, K_) / math.sqrt(dim_V),
                       axis=2)
    O_ = Q_ + jnp.einsum("bqk,bkd->bqd", A, V_)
    O = jnp.concatenate([O_[h * B:(h + 1) * B] for h in range(num_heads)],
                        axis=2)
    O = O + jax.nn.relu(O @ wo + bo[0])
    return O


if __name__ == "__main__":
    B, Nq, Nk = 2, 8, 12
    dim_Q, dim_K, dim_V, num_heads = 16, 24, 32, 4

    key = jax.random.PRNGKey(0)
    ks = jax.random.split(key, 10)
    Q = jax.random.normal(ks[0], (B, Nq, dim_Q), jnp.float32)
    K = jax.random.normal(ks[1], (B, Nk, dim_K), jnp.float32)

    # Deterministic parameter init (weights stored (in, out); biases (1, out)).
    def lin(kw, kb, din, dout):
        bound = 1.0 / math.sqrt(din)
        w = jax.random.uniform(kw, (din, dout), jnp.float32, -bound, bound)
        b = jax.random.uniform(kb, (1, dout), jnp.float32, -bound, bound)
        return w, b

    wq, bq = lin(ks[2], ks[3], dim_Q, dim_V)
    wk, bk = lin(ks[4], ks[5], dim_K, dim_V)
    wv, bv = lin(ks[6], ks[7], dim_K, dim_V)
    wo, bo = lin(ks[8], ks[9], dim_V, dim_V)
    params = (wq, bq, wk, bk, wv, bv, wo, bo)

    out = mab_forward(Q, K, params, dim_V=dim_V, num_heads=num_heads)
    out = jax.block_until_ready(out)

    ref = mab_reference(Q, K, params, dim_V=dim_V, num_heads=num_heads)
    assert out.shape == (B, Nq, dim_V)
    # Tolerance accounts for the approximate (EUP) reciprocal in the softmax
    # denominator.
    assert jnp.allclose(out, ref, atol=2e-2, rtol=2e-2), "mismatch vs reference"

    print("KERNEL_OK")
</pallas_src>

<mosaic_0001>
module attributes {stable_mosaic.version = 11 : i64} {
  func.func @mab_kernel(%arg0: i32, %arg1: memref<2x8x16xf32, #tpu.memory_space<vmem>>, %arg2: memref<2x16x24xf32, #tpu.memory_space<vmem>>, %arg3: memref<16x32xf32, #tpu.memory_space<vmem>>, %arg4: memref<1x32xf32, #tpu.memory_space<vmem>>, %arg5: memref<24x64xf32, #tpu.memory_space<vmem>>, %arg6: memref<1x64xf32, #tpu.memory_space<vmem>>, %arg7: memref<32x32xf32, #tpu.memory_space<vmem>>, %arg8: memref<1x32xf32, #tpu.memory_space<vmem>>, %arg9: memref<2x8x32xf32, #tpu.memory_space<vmem>>) attributes {dimension_semantics = [#tpu.dimension_semantics<parallel>], iteration_bounds = array<i64: 1>, scalar_prefetch = 0 : i64, scratch_operands = 0 : i64, tpu.core_type = #tpu.core_type<tc>, window_params = [{transform_indices = @transform_0, window_bounds = array<i64: 2, 8, 16>}, {transform_indices = @transform_1, window_bounds = array<i64: 2, 16, 24>}, {pipeline_mode = #tpu.pipeline_mode<synchronous>, transform_indices = @transform_2, window_bounds = array<i64: 16, 32>}, {pipeline_mode = #tpu.pipeline_mode<synchronous>, transform_indices = @transform_3, window_bounds = array<i64: 1, 32>}, {pipeline_mode = #tpu.pipeline_mode<synchronous>, transform_indices = @transform_4, window_bounds = array<i64: 24, 64>}, {pipeline_mode = #tpu.pipeline_mode<synchronous>, transform_indices = @transform_5, window_bounds = array<i64: 1, 64>}, {pipeline_mode = #tpu.pipeline_mode<synchronous>, transform_indices = @transform_6, window_bounds = array<i64: 32, 32>}, {pipeline_mode = #tpu.pipeline_mode<synchronous>, transform_indices = @transform_7, window_bounds = array<i64: 1, 32>}, {transform_indices = @transform_8, window_bounds = array<i64: 2, 8, 32>}]} {
    %c0 = arith.constant 0 : index
    %c0_0 = arith.constant 0 : index
    %c0_1 = arith.constant 0 : index
    %0 = vector.load %arg1[%c0, %c0_0, %c0_1] : memref<2x8x16xf32, #tpu.memory_space<vmem>>, vector<2x8x16xf32>
    %1 = vector.shape_cast %0 : vector<2x8x16xf32> to vector<16x16xf32>
    %c0_2 = arith.constant 0 : index
    %c0_3 = arith.constant 0 : index
    %c0_4 = arith.constant 0 : index
    %2 = vector.load %arg2[%c0_2, %c0_3, %c0_4] : memref<2x16x24xf32, #tpu.memory_space<vmem>>, vector<2x16x24xf32>
    %3 = vector.shape_cast %2 : vector<2x16x24xf32> to vector<32x24xf32>
    %c0_5 = arith.constant 0 : index
    %c0_6 = arith.constant 0 : index
    %4 = vector.load %arg3[%c0_5, %c0_6] : memref<16x32xf32, #tpu.memory_space<vmem>>, vector<16x32xf32>
    %cst = arith.constant dense<0.000000e+00> : vector<16x32xf32>
    %5 = tpu.matmul %1, %4, %cst {dimension_numbers = #tpu.dot_dimension_numbers<[1], [0], [0], [1], [0, 0, 1, 1], [], []>} : vector<16x16xf32>, vector<16x32xf32>, vector<16x32xf32> -> vector<16x32xf32>
    %c0_7 = arith.constant 0 : index
    %c0_8 = arith.constant 0 : index
    %6 = vector.load %arg4[%c0_7, %c0_8] : memref<1x32xf32, #tpu.memory_space<vmem>>, vector<1x32xf32>
    %7 = vector.broadcast %6 : vector<1x32xf32> to vector<16x32xf32>
    %8 = arith.addf %5, %7 : vector<16x32xf32>
    %c0_9 = arith.constant 0 : index
    %c0_10 = arith.constant 0 : index
    %9 = vector.load %arg5[%c0_9, %c0_10] : memref<24x64xf32, #tpu.memory_space<vmem>>, vector<24x64xf32>
    %cst_11 = arith.constant dense<0.000000e+00> : vector<32x64xf32>
    %10 = tpu.matmul %3, %9, %cst_11 {dimension_numbers = #tpu.dot_dimension_numbers<[1], [0], [0], [1], [0, 0, 1, 1], [], []>} : vector<32x24xf32>, vector<24x64xf32>, vector<32x64xf32> -> vector<32x64xf32>
    %c0_12 = arith.constant 0 : index
    %c0_13 = arith.constant 0 : index
    %11 = vector.load %arg6[%c0_12, %c0_13] : memref<1x64xf32, #tpu.memory_space<vmem>>, vector<1x64xf32>
    %12 = vector.broadcast %11 : vector<1x64xf32> to vector<32x64xf32>
    %13 = arith.addf %10, %12 : vector<32x64xf32>
    %14 = vector.shape_cast %8 : vector<16x32xf32> to vector<2x8x32xf32>
    %15 = vector.shape_cast %13 : vector<32x64xf32> to vector<2x16x64xf32>
    %16 = vector.extract_strided_slice %15 {offsets = [0, 0, 0], sizes = [2, 16, 32], strides = [1, 1, 1]} : vector<2x16x64xf32> to vector<2x16x32xf32>
    %17 = vector.extract_strided_slice %15 {offsets = [0, 0, 32], sizes = [2, 16, 32], strides = [1, 1, 1]} : vector<2x16x64xf32> to vector<2x16x32xf32>
    %18 = tpu.iota {dimensions = array<i32: 2>} : vector<1x1x16xi32>
    %c12_i32 = arith.constant 12 : i32
    %19 = vector.broadcast %c12_i32 : i32 to vector<1x1x16xi32>
    %20 = arith.cmpi slt, %18, %19 : vector<1x1x16xi32>
    %cst_14 = arith.constant 0.000000e+00 : f32
    %cst_15 = arith.constant -1.000000e+30 : f32
    %21 = vector.broadcast %cst_14 : f32 to vector<1x1x16xf32>
    %22 = vector.broadcast %cst_15 : f32 to vector<1x1x16xf32>
    %23 = arith.select %20, %21, %22 : vector<1x1x16xi1>, vector<1x1x16xf32>
    %24 = vector.extract_strided_slice %14 {offsets = [0, 0, 0], sizes = [2, 8, 8], strides = [1, 1, 1]} : vector<2x8x32xf32> to vector<2x8x8xf32>
    %25 = vector.extract_strided_slice %16 {offsets = [0, 0, 0], sizes = [2, 16, 8], strides = [1, 1, 1]} : vector<2x16x32xf32> to vector<2x16x8xf32>
    %26 = vector.extract_strided_slice %17 {offsets = [0, 0, 0], sizes = [2, 16, 8], strides = [1, 1, 1]} : vector<2x16x32xf32> to vector<2x16x8xf32>
    %cst_16 = arith.constant 0.176776692 : f32
    %27 = vector.broadcast %cst_16 : f32 to vector<2x8x8xf32>
    %28 = arith.mulf %24, %27 : vector<2x8x8xf32>
    "tpu.trace_start"() <{level = 10 : i32, message = "bqd,bkd->bqk"}> : () -> ()
    %cst_17 = arith.constant dense<0.000000e+00> : vector<2x8x16xf32>
    %29 = tpu.matmul %28, %25, %cst_17 {dimension_numbers = #tpu.dot_dimension_numbers<[2], [2], [1], [1], [0, 0, 0, 1, 1, 1], [0], [0]>} : vector<2x8x8xf32>, vector<2x16x8xf32>, vector<2x8x16xf32> -> vector<2x8x16xf32>
    "tpu.trace_stop"() : () -> ()
    %30 = vector.broadcast %23 : vector<1x1x16xf32> to vector<2x8x16xf32>
    %31 = arith.addf %29, %30 : vector<2x8x16xf32>
    %cst_18 = arith.constant dense<0xFF800000> : vector<2x8xf32>
    %32 = vector.multi_reduction <maximumf>, %31, %cst_18 [2] : vector<2x8x16xf32> to vector<2x8xf32>
    %33 = vector.shape_cast %32 : vector<2x8xf32> to vector<2x8x1xf32>
    %34 = vector.broadcast %33 : vector<2x8x1xf32> to vector<2x8x16xf32>
    %35 = arith.subf %31, %34 : vector<2x8x16xf32>
    %36 = math.exp %35 : vector<2x8x16xf32>
    %cst_19 = arith.constant dense<0.000000e+00> : vector<2x8xf32>
    %37 = vector.multi_reduction <add>, %36, %cst_19 [2] : vector<2x8x16xf32> to vector<2x8xf32>
    %38 = vector.shape_cast %37 : vector<2x8xf32> to vector<2x8x1xf32>
    %39 = tpu.reciprocal %38 {approx = true} : vector<2x8x1xf32> -> vector<2x8x1xf32>
    %40 = vector.broadcast %39 : vector<2x8x1xf32> to vector<2x8x16xf32>
    %41 = arith.mulf %36, %40 : vector<2x8x16xf32>
    "tpu.trace_start"() <{level = 10 : i32, message = "bqk,bkd->bqd"}> : () -> ()
    %cst_20 = arith.constant dense<0.000000e+00> : vector<2x8x8xf32>
    %42 = tpu.matmul %41, %26, %cst_20 {dimension_numbers = #tpu.dot_dimension_numbers<[2], [1], [1], [2], [0, 0, 0, 1, 1, 2], [0], [0]>} : vector<2x8x16xf32>, vector<2x16x8xf32>, vector<2x8x8xf32> -> vector<2x8x8xf32>
    "tpu.trace_stop"() : () -> ()
    %43 = arith.addf %24, %42 : vector<2x8x8xf32>
    %44 = vector.extract_strided_slice %14 {offsets = [0, 0, 8], sizes = [2, 8, 8], strides = [1, 1, 1]} : vector<2x8x32xf32> to vector<2x8x8xf32>
    %45 = vector.extract_strided_slice %16 {offsets = [0, 0, 8], sizes = [2, 16, 8], strides = [1, 1, 1]} : vector<2x16x32xf32> to vector<2x16x8xf32>
    %46 = vector.extract_strided_slice %17 {offsets = [0, 0, 8], sizes = [2, 16, 8], strides = [1, 1, 1]} : vector<2x16x32xf32> to vector<2x16x8xf32>
    %cst_21 = arith.constant 0.176776692 : f32
    %47 = vector.broadcast %cst_21 : f32 to vector<2x8x8xf32>
    %48 = arith.mulf %44, %47 : vector<2x8x8xf32>
    "tpu.trace_start"() <{level = 10 : i32, message = "bqd,bkd->bqk"}> : () -> ()
    %cst_22 = arith.constant dense<0.000000e+00> : vector<2x8x16xf32>
    %49 = tpu.matmul %48, %45, %cst_22 {dimension_numbers = #tpu.dot_dimension_numbers<[2], [2], [1], [1], [0, 0, 0, 1, 1, 1], [0], [0]>} : vector<2x8x8xf32>, vector<2x16x8xf32>, vector<2x8x16xf32> -> vector<2x8x16xf32>
    "tpu.trace_stop"() : () -> ()
    %50 = vector.broadcast %23 : vector<1x1x16xf32> to vector<2x8x16xf32>
    %51 = arith.addf %49, %50 : vector<2x8x16xf32>
    %cst_23 = arith.constant dense<0xFF800000> : vector<2x8xf32>
    %52 = vector.multi_reduction <maximumf>, %51, %cst_23 [2] : vector<2x8x16xf32> to vector<2x8xf32>
    %53 = vector.shape_cast %52 : vector<2x8xf32> to vector<2x8x1xf32>
    %54 = vector.broadcast %53 : vector<2x8x1xf32> to vector<2x8x16xf32>
    %55 = arith.subf %51, %54 : vector<2x8x16xf32>
    %56 = math.exp %55 : vector<2x8x16xf32>
    %cst_24 = arith.constant dense<0.000000e+00> : vector<2x8xf32>
    %57 = vector.multi_reduction <add>, %56, %cst_24 [2] : vector<2x8x16xf32> to vector<2x8xf32>
    %58 = vector.shape_cast %57 : vector<2x8xf32> to vector<2x8x1xf32>
    %59 = tpu.reciprocal %58 {approx = true} : vector<2x8x1xf32> -> vector<2x8x1xf32>
    %60 = vector.broadcast %59 : vector<2x8x1xf32> to vector<2x8x16xf32>
    %61 = arith.mulf %56, %60 : vector<2x8x16xf32>
    "tpu.trace_start"() <{level = 10 : i32, message = "bqk,bkd->bqd"}> : () -> ()
    %cst_25 = arith.constant dense<0.000000e+00> : vector<2x8x8xf32>
    %62 = tpu.matmul %61, %46, %cst_25 {dimension_numbers = #tpu.dot_dimension_numbers<[2], [1], [1], [2], [0, 0, 0, 1, 1, 2], [0], [0]>} : vector<2x8x16xf32>, vector<2x16x8xf32>, vector<2x8x8xf32> -> vector<2x8x8xf32>
    "tpu.trace_stop"() : () -> ()
    %63 = arith.addf %44, %62 : vector<2x8x8xf32>
    %64 = vector.extract_strided_slice %14 {offsets = [0, 0, 16], sizes = [2, 8, 8], strides = [1, 1, 1]} : vector<2x8x32xf32> to vector<2x8x8xf32>
    %65 = vector.extract_strided_slice %16 {offsets = [0, 0, 16], sizes = [2, 16, 8], strides = [1, 1, 1]} : vector<2x16x32xf32> to vector<2x16x8xf32>
    %66 = vector.extract_strided_slice %17 {offsets = [0, 0, 16], sizes = [2, 16, 8], strides = [1, 1, 1]} : vector<2x16x32xf32> to vector<2x16x8xf32>
    %cst_26 = arith.constant 0.176776692 : f32
    %67 = vector.broadcast %cst_26 : f32 to vector<2x8x8xf32>
    %68 = arith.mulf %64, %67 : vector<2x8x8xf32>
    "tpu.trace_start"() <{level = 10 : i32, message = "bqd,bkd->bqk"}> : () -> ()
    %cst_27 = arith.constant dense<0.000000e+00> : vector<2x8x16xf32>
    %69 = tpu.matmul %68, %65, %cst_27 {dimension_numbers = #tpu.dot_dimension_numbers<[2], [2], [1], [1], [0, 0, 0, 1, 1, 1], [0], [0]>} : vector<2x8x8xf32>, vector<2x16x8xf32>, vector<2x8x16xf32> -> vector<2x8x16xf32>
    "tpu.trace_stop"() : () -> ()
    %70 = vector.broadcast %23 : vector<1x1x16xf32> to vector<2x8x16xf32>
    %71 = arith.addf %69, %70 : vector<2x8x16xf32>
    %cst_28 = arith.constant dense<0xFF800000> : vector<2x8xf32>
    %72 = vector.multi_reduction <maximumf>, %71, %cst_28 [2] : vector<2x8x16xf32> to vector<2x8xf32>
    %73 = vector.shape_cast %72 : vector<2x8xf32> to vector<2x8x1xf32>
    %74 = vector.broadcast %73 : vector<2x8x1xf32> to vector<2x8x16xf32>
    %75 = arith.subf %71, %74 : vector<2x8x16xf32>
    %76 = math.exp %75 : vector<2x8x16xf32>
    %cst_29 = arith.constant dense<0.000000e+00> : vector<2x8xf32>
    %77 = vector.multi_reduction <add>, %76, %cst_29 [2] : vector<2x8x16xf32> to vector<2x8xf32>
    %78 = vector.shape_cast %77 : vector<2x8xf32> to vector<2x8x1xf32>
    %79 = tpu.reciprocal %78 {approx = true} : vector<2x8x1xf32> -> vector<2x8x1xf32>
    %80 = vector.broadcast %79 : vector<2x8x1xf32> to vector<2x8x16xf32>
    %81 = arith.mulf %76, %80 : vector<2x8x16xf32>
    "tpu.trace_start"() <{level = 10 : i32, message = "bqk,bkd->bqd"}> : () -> ()
    %cst_30 = arith.constant dense<0.000000e+00> : vector<2x8x8xf32>
    %82 = tpu.matmul %81, %66, %cst_30 {dimension_numbers = #tpu.dot_dimension_numbers<[2], [1], [1], [2], [0, 0, 0, 1, 1, 2], [0], [0]>} : vector<2x8x16xf32>, vector<2x16x8xf32>, vector<2x8x8xf32> -> vector<2x8x8xf32>
    "tpu.trace_stop"() : () -> ()
    %83 = arith.addf %64, %82 : vector<2x8x8xf32>
    %84 = vector.extract_strided_slice %14 {offsets = [0, 0, 24], sizes = [2, 8, 8], strides = [1, 1, 1]} : vector<2x8x32xf32> to vector<2x8x8xf32>
    %85 = vector.extract_strided_slice %16 {offsets = [0, 0, 24], sizes = [2, 16, 8], strides = [1, 1, 1]} : vector<2x16x32xf32> to vector<2x16x8xf32>
    %86 = vector.extract_strided_slice %17 {offsets = [0, 0, 24], sizes = [2, 16, 8], strides = [1, 1, 1]} : vector<2x16x32xf32> to vector<2x16x8xf32>
    %cst_31 = arith.constant 0.176776692 : f32
    %87 = vector.broadcast %cst_31 : f32 to vector<2x8x8xf32>
    %88 = arith.mulf %84, %87 : vector<2x8x8xf32>
    "tpu.trace_start"() <{level = 10 : i32, message = "bqd,bkd->bqk"}> : () -> ()
    %cst_32 = arith.constant dense<0.000000e+00> : vector<2x8x16xf32>
    %89 = tpu.matmul %88, %85, %cst_32 {dimension_numbers = #tpu.dot_dimension_numbers<[2], [2], [1], [1], [0, 0, 0, 1, 1, 1], [0], [0]>} : vector<2x8x8xf32>, vector<2x16x8xf32>, vector<2x8x16xf32> -> vector<2x8x16xf32>
    "tpu.trace_stop"() : () -> ()
    %90 = vector.broadcast %23 : vector<1x1x16xf32> to vector<2x8x16xf32>
    %91 = arith.addf %89, %90 : vector<2x8x16xf32>
    %cst_33 = arith.constant dense<0xFF800000> : vector<2x8xf32>
    %92 = vector.multi_reduction <maximumf>, %91, %cst_33 [2] : vector<2x8x16xf32> to vector<2x8xf32>
    %93 = vector.shape_cast %92 : vector<2x8xf32> to vector<2x8x1xf32>
    %94 = vector.broadcast %93 : vector<2x8x1xf32> to vector<2x8x16xf32>
    %95 = arith.subf %91, %94 : vector<2x8x16xf32>
    %96 = math.exp %95 : vector<2x8x16xf32>
    %cst_34 = arith.constant dense<0.000000e+00> : vector<2x8xf32>
    %97 = vector.multi_reduction <add>, %96, %cst_34 [2] : vector<2x8x16xf32> to vector<2x8xf32>
    %98 = vector.shape_cast %97 : vector<2x8xf32> to vector<2x8x1xf32>
    %99 = tpu.reciprocal %98 {approx = true} : vector<2x8x1xf32> -> vector<2x8x1xf32>
    %100 = vector.broadcast %99 : vector<2x8x1xf32> to vector<2x8x16xf32>
    %101 = arith.mulf %96, %100 : vector<2x8x16xf32>
    "tpu.trace_start"() <{level = 10 : i32, message = "bqk,bkd->bqd"}> : () -> ()
    %cst_35 = arith.constant dense<0.000000e+00> : vector<2x8x8xf32>
    %102 = tpu.matmul %101, %86, %cst_35 {dimension_numbers = #tpu.dot_dimension_numbers<[2], [1], [1], [2], [0, 0, 0, 1, 1, 2], [0], [0]>} : vector<2x8x16xf32>, vector<2x16x8xf32>, vector<2x8x8xf32> -> vector<2x8x8xf32>
    "tpu.trace_stop"() : () -> ()
    %103 = arith.addf %84, %102 : vector<2x8x8xf32>
    %104 = tpu.concatenate %43, %63, %83, %103 in 2 : vector<2x8x8xf32>, vector<2x8x8xf32>, vector<2x8x8xf32>, vector<2x8x8xf32> -> vector<2x8x32xf32>
    %105 = vector.shape_cast %104 : vector<2x8x32xf32> to vector<16x32xf32>
    %c0_36 = arith.constant 0 : index
    %c0_37 = arith.constant 0 : index
    %106 = vector.load %arg7[%c0_36, %c0_37] : memref<32x32xf32, #tpu.memory_space<vmem>>, vector<32x32xf32>
    %cst_38 = arith.constant dense<0.000000e+00> : vector<16x32xf32>
    %107 = tpu.matmul %105, %106, %cst_38 {dimension_numbers = #tpu.dot_dimension_numbers<[1], [0], [0], [1], [0, 0, 1, 1], [], []>} : vector<16x32xf32>, vector<32x32xf32>, vector<16x32xf32> -> vector<16x32xf32>
    %c0_39 = arith.constant 0 : index
    %c0_40 = arith.constant 0 : index
    %108 = vector.load %arg8[%c0_39, %c0_40] : memref<1x32xf32, #tpu.memory_space<vmem>>, vector<1x32xf32>
    %109 = vector.broadcast %108 : vector<1x32xf32> to vector<16x32xf32>
    %110 = arith.addf %107, %109 : vector<16x32xf32>
    %cst_41 = arith.constant 0.000000e+00 : f32
    %111 = vector.broadcast %cst_41 : f32 to vector<16x32xf32>
    %112 = arith.maximumf %110, %111 : vector<16x32xf32>
    %113 = arith.addf %105, %112 : vector<16x32xf32>
    %114 = vector.shape_cast %113 : vector<16x32xf32> to vector<2x8x32xf32>
    %c0_42 = arith.constant 0 : index
    %c0_43 = arith.constant 0 : index
    %c0_44 = arith.constant 0 : index
    %115 = vector.load %arg9[%c0_42, %c0_43, %c0_44] : memref<2x8x32xf32, #tpu.memory_space<vmem>>, vector<2x8x32xf32>
    tpu.vector_store %arg9[%c0_42, %c0_43, %c0_44], %114 {strides = array<i32>} : memref<2x8x32xf32, #tpu.memory_space<vmem>>, vector<2x8x32xf32>,
    return
  }
  func.func @transform_0(%arg0: i32) -> (i32, i32, i32) {
    %c0_i32 = arith.constant 0 : i32
    %c0_i32_0 = arith.constant 0 : i32
    %c0_i32_1 = arith.constant 0 : i32
    return %arg0, %c0_i32, %c0_i32_0 : i32, i32, i32
  }
  func.func @transform_1(%arg0: i32) -> (i32, i32, i32) {
    %c0_i32 = arith.constant 0 : i32
    %c0_i32_0 = arith.constant 0 : i32
    %c0_i32_1 = arith.constant 0 : i32
    return %arg0, %c0_i32, %c0_i32_0 : i32, i32, i32
  }
  func.func @transform_2(%arg0: i32) -> (i32, i32) {
    %c0_i32 = arith.constant 0 : i32
    %c0_i32_0 = arith.constant 0 : i32
    %c0_i32_1 = arith.constant 0 : i32
    return %c0_i32, %c0_i32_0 : i32, i32
  }
  func.func @transform_3(%arg0: i32) -> (i32, i32) {
    %c0_i32 = arith.constant 0 : i32
    %c0_i32_0 = arith.constant 0 : i32
    %c0_i32_1 = arith.constant 0 : i32
    return %c0_i32, %c0_i32_0 : i32, i32
  }
  func.func @transform_4(%arg0: i32) -> (i32, i32) {
    %c0_i32 = arith.constant 0 : i32
    %c0_i32_0 = arith.constant 0 : i32
    %c0_i32_1 = arith.constant 0 : i32
    return %c0_i32, %c0_i32_0 : i32, i32
  }
  func.func @transform_5(%arg0: i32) -> (i32, i32) {
    %c0_i32 = arith.constant 0 : i32
    %c0_i32_0 = arith.constant 0 : i32
    %c0_i32_1 = arith.constant 0 : i32
    return %c0_i32, %c0_i32_0 : i32, i32
  }
  func.func @transform_6(%arg0: i32) -> (i32, i32) {
    %c0_i32 = arith.constant 0 : i32
    %c0_i32_0 = arith.constant 0 : i32
    %c0_i32_1 = arith.constant 0 : i32
    return %c0_i32, %c0_i32_0 : i32, i32
  }
  func.func @transform_7(%arg0: i32) -> (i32, i32) {
    %c0_i32 = arith.constant 0 : i32
    %c0_i32_0 = arith.constant 0 : i32
    %c0_i32_1 = arith.constant 0 : i32
    return %c0_i32, %c0_i32_0 : i32, i32
  }
  func.func @transform_8(%arg0: i32) -> (i32, i32, i32) {
    %c0_i32 = arith.constant 0 : i32
    %c0_i32_0 = arith.constant 0 : i32
    %c0_i32_1 = arith.constant 0 : i32
    return %arg0, %c0_i32, %c0_i32_0 : i32, i32, i32
  }
}

</mosaic_0001>

<llo_original>
// kernel: tpu_custom_call.1
$region0: #{tpu_custom_call.1}
  #allocation0 [shape = 'u32[]', space=smem, size = 0x4, offset = 0x4, fixed_abs, tag = 'smem constant byte address 0x4 - core index']
  #allocation1 [shape = 'u32[72,128]{1,0:T(1,128)}', space=vmem, size = 0x9000, scoped, tag = 'internal scratch']
  %s0 = inlined_call_operand.hbm [shape: f32[2,8,16], index: 0, kind: input, shape index: {}]
  %s1 = inlined_call_operand.hbm [shape: f32[2,16,24], index: 1, kind: input, shape index: {}]
  %s2 = inlined_call_operand.hbm [shape: f32[16,32], index: 2, kind: input, shape index: {}]
  %s3 = inlined_call_operand.vmem [shape: f32[1,32], index: 3, kind: input, shape index: {}]
  %s4 = inlined_call_operand.hbm [shape: f32[24,64], index: 4, kind: input, shape index: {}]
  %s5 = inlined_call_operand.vmem [shape: f32[1,64], index: 5, kind: input, shape index: {}]
  %s6 = inlined_call_operand.hbm [shape: f32[32,32], index: 6, kind: input, shape index: {}]
  %s7 = inlined_call_operand.vmem [shape: f32[1,32], index: 7, kind: input, shape index: {}]
  %s8 = inlined_call_operand.hbm [shape: f32[2,8,32], index: 8, kind: output, shape index: {}]
  %s9 = sld [smem:[#allocation0]]
  $region62: #{tpu_custom_call.1} parent=0
    _
  %s11 = ssub.s32 1, %s9
  %s12 = scalar_select 0, %s11, %s9
  $region1: #{tpu_custom_call.1} parent=0
    #allocation2 [shape = 'u8[8192]{0}', space=vmem, size = 0x2000, scoped, tag = 'input window, operand 0, single buffered']
    #allocation3 [shape = 's32[1]{0}', space=sflag, size = 0x4, scoped, tag = 'scoped memory for tpu_custom_call.1']
    #allocation4 [shape = 's32[1]{0}', space=sflag, size = 0x4, scoped, tag = 'scoped memory for tpu_custom_call.1']
    #allocation5 [shape = 'u8[16384]{0}', space=vmem, size = 0x4000, scoped, tag = 'input window, operand 1, single buffered']
    #allocation6 [shape = 's32[1]{0}', space=sflag, size = 0x4, scoped, tag = 'scoped memory for tpu_custom_call.1']
    #allocation7 [shape = 'u8[8192]{0}', space=vmem, size = 0x2000, scoped, tag = 'input window, operand 2, single buffered']
    #allocation8 [shape = 'u8[12288]{0}', space=vmem, size = 0x3000, scoped, tag = 'input window, operand 4, single buffered']
    #allocation9 [shape = 's32[1]{0}', space=sflag, size = 0x4, scoped, tag = 'scoped memory for tpu_custom_call.1']
    #allocation10 [shape = 'u8[16384]{0}', space=vmem, size = 0x4000, scoped, tag = 'input window, operand 6, single buffered']
    #allocation11 [shape = 'u8[8192]{0}', space=vmem, size = 0x2000, scoped, tag = 'output window, operand 0, single buffered']
    %13 = vsyncpa [#allocation3], 0
    %14 = vsyncpa [#allocation6], 0
    %15 = vsyncpa [#allocation9], 0
    %16 = vsyncpa [#allocation4], 0
    // Predicated region
    $region2: #{tpu_custom_call.1} parent=1 // pred_check
      _
    $region3: #{tpu_custom_call.1} parent=1 // pred_check_branch
      %18 = sbr.rel (0) target = $region5
    $region4: #{tpu_custom_call.1} parent=1 // pred_region
      %20 = vsyncadd [#allocation3], 0
      %s21 = sshll.u32 %s0, 4
      %s22 = int_to_ptr.hbm [resolvable:$true] %s21
      %s23 = sshll.u32 [#allocation2], 4
      %s24 = int_to_ptr.vmem [resolvable:$true] %s23
      %29 = dma.hbm_to_vmem [thread:$0]  %s22, 256, %s24, [#allocation3], 128, 128, 8
    $region5: #{tpu_custom_call.1} parent=1 // pred_fallthru
      _
    // Predicated region
    $region6: #{tpu_custom_call.1} parent=1 // pred_check
      _
    $region7: #{tpu_custom_call.1} parent=1 // pred_check_branch
      %31 = sbr.rel (0) target = $region9
    $region8: #{tpu_custom_call.1} parent=1 // pred_region
      %33 = vsyncadd [#allocation6], 0
      %s34 = sshll.u32 %s1, 4
      %s35 = int_to_ptr.hbm [resolvable:$true] %s34
      %s36 = sshll.u32 [#allocation5], 4
      %s37 = int_to_ptr.vmem [resolvable:$true] %s36
      %42 = dma.hbm_to_vmem [thread:$0]  %s35, 512, %s37, [#allocation6], 128, 128, 8
    $region9: #{tpu_custom_call.1} parent=1 // pred_fallthru
      _
    // Predicated region
    $region10: #{tpu_custom_call.1} parent=1 // pred_check
      _
    $region11: #{tpu_custom_call.1} parent=1 // pred_check_branch
      %44 = sbr.rel (0) target = $region13
    $region12: #{tpu_custom_call.1} parent=1 // pred_region
      %46 = vsyncadd [#allocation6], 0
      %s47 = sshll.u32 %s2, 4
      %s48 = int_to_ptr.hbm [resolvable:$true] %s47
      %s49 = sshll.u32 [#allocation7], 4
      %s50 = int_to_ptr.vmem [resolvable:$true] %s49
      %55 = dma.hbm_to_vmem [thread:$0]  %s48, 256, %s50, [#allocation6], 128, 128, 8
    $region13: #{tpu_custom_call.1} parent=1 // pred_fallthru
      _
    // Predicated region
    $region14: #{tpu_custom_call.1} parent=1 // pred_check
      _
    $region15: #{tpu_custom_call.1} parent=1 // pred_check_branch
      %57 = sbr.rel (0) target = $region17
    $region16: #{tpu_custom_call.1} parent=1 // pred_region
      _
    $region17: #{tpu_custom_call.1} parent=1 // pred_fallthru
      _
    // Predicated region
    $region18: #{tpu_custom_call.1} parent=1 // pred_check
      _
    $region19: #{tpu_custom_call.1} parent=1 // pred_check_branch
      %59 = sbr.rel (0) target = $region21
    $region20: #{tpu_custom_call.1} parent=1 // pred_region
      %61 = vsyncadd [#allocation9], 0
      %s62 = sshll.u32 %s4, 4
      %s63 = int_to_ptr.hbm [resolvable:$true] %s62
      %s64 = sshll.u32 [#allocation8], 4
      %s65 = int_to_ptr.vmem [resolvable:$true] %s64
      %70 = dma.hbm_to_vmem [thread:$0]  %s63, 384, %s65, [#allocation9], 128, 128, 8
    $region21: #{tpu_custom_call.1} parent=1 // pred_fallthru
      _
    // Predicated region
    $region22: #{tpu_custom_call.1} parent=1 // pred_check
      _
    $region23: #{tpu_custom_call.1} parent=1 // pred_check_branch
      %72 = sbr.rel (0) target = $region25
    $region24: #{tpu_custom_call.1} parent=1 // pred_region
      _
    $region25: #{tpu_custom_call.1} parent=1 // pred_fallthru
      _
    // Predicated region
    $region26: #{tpu_custom_call.1} parent=1 // pred_check
      _
    $region27: #{tpu_custom_call.1} parent=1 // pred_check_branch
      %74 = sbr.rel (0) target = $region29
    $region28: #{tpu_custom_call.1} parent=1 // pred_region
      %76 = vsyncadd [#allocation9], 0
      %s77 = sshll.u32 %s6, 4
      %s78 = int_to_ptr.hbm [resolvable:$true] %s77
      %s79 = sshll.u32 [#allocation10], 4
      %s80 = int_to_ptr.vmem [resolvable:$true] %s79
      %85 = dma.hbm_to_vmem [thread:$0]  %s78, 512, %s80, [#allocation9], 128, 128, 8
    $region29: #{tpu_custom_call.1} parent=1 // pred_fallthru
      _
    // Predicated region
    $region30: #{tpu_custom_call.1} parent=1 // pred_check
      _
    $region31: #{tpu_custom_call.1} parent=1 // pred_check_branch
      %87 = sbr.rel (0) target = $region33
    $region32: #{tpu_custom_call.1} parent=1 // pred_region
      _
    $region33: #{tpu_custom_call.1} parent=1 // pred_fallthru
      _
    // Predicated region
    $region34: #{tpu_custom_call.1} parent=1 // pred_check
      _
    $region35: #{tpu_custom_call.1} parent=1 // pred_check_branch
      %89 = sbr.rel (0) target = $region37
    $region36: #{tpu_custom_call.1} parent=1 // pred_region
      %91 = dma.done [#allocation3], 256
    $region37: #{tpu_custom_call.1} parent=1 // pred_fallthru
      _
    // Predicated region
    $region38: #{tpu_custom_call.1} parent=1 // pred_check
      _
    $region39: #{tpu_custom_call.1} parent=1 // pred_check_branch
      %93 = sbr.rel (0) target = $region41
    $region40: #{tpu_custom_call.1} parent=1 // pred_region
      %95 = dma.done [#allocation6], 512
    $region41: #{tpu_custom_call.1} parent=1 // pred_fallthru
      _
    // Predicated region
    $region42: #{tpu_custom_call.1} parent=1 // pred_check
      _
    $region43: #{tpu_custom_call.1} parent=1 // pred_check_branch
      %97 = sbr.rel (0) target = $region45
    $region44: #{tpu_custom_call.1} parent=1 // pred_region
      %99 = dma.done [#allocation6], 256
    $region45: #{tpu_custom_call.1} parent=1 // pred_fallthru
      _
    // Predicated region
    $region46: #{tpu_custom_call.1} parent=1 // pred_check
      _
    $region47: #{tpu_custom_call.1} parent=1 // pred_check_branch
      %101 = sbr.rel (0) target = $region49
    $region48: #{tpu_custom_call.1} parent=1 // pred_region
      %103 = dma.done [#allocation9], 384
    $region49: #{tpu_custom_call.1} parent=1 // pred_fallthru
      _
    // Predicated region
    $region50: #{tpu_custom_call.1} parent=1 // pred_check
      _
    $region51: #{tpu_custom_call.1} parent=1 // pred_check_branch
      %105 = sbr.rel (0) target = $region53
    $region52: #{tpu_custom_call.1} parent=1 // pred_region
      %107 = dma.done [#allocation9], 512
    $region53: #{tpu_custom_call.1} parent=1 // pred_fallthru
      _
    %v108 = vld [vmem:[#allocation2] sm:$0xff]
    %v109 = vld [vmem:[#allocation2 + $0x8] sm:$0xff]
    %v110 = vld [vmem:[#allocation5] sm:$0xff]
    %v111 = vld [vmem:[#allocation5 + $0x8] sm:$0xff]
    %v112 = vld [vmem:[#allocation5 + $0x10] sm:$0xff]
    %v113 = vld [vmem:[#allocation5 + $0x18] sm:$0xff]
    %v114 = vld [vmem:[#allocation7] sm:$0xff]
    %v115 = vld [vmem:[#allocation7 + $0x8] sm:$0xff]
    %v116 = vld [vmem:[%s3] sm:$0x1]
    %v118 = vperm.slane %v116, 0
    %vm120 = vcmask 130048
    %v122 = vsel %vm120, %v108, 0
    %v125 = vsel %vm120, %v109, 0
    %127 = vmatpush.msra.mxu0 0.0
    %128 = vmatpush.msra.mxu0 0.0
    %129 = vmatpush.msra.mxu0 0.0
    %130 = vmatpush.msra.mxu0 0.0
    %131 = vmatpush.msra.mxu0 0.0
    %132 = vmatpush.msra.mxu0 0.0
    %133 = vmatpush.msra.mxu0 0.0
    %134 = vmatpush.msra.mxu0 0.0
    %135 = vmatpush.msra.mxu0 0.0
    %136 = vmatpush.msra.mxu0 0.0
    %137 = vmatpush.msra.mxu0 0.0
    %138 = vmatpush.msra.mxu0 0.0
    %139 = vmatpush.msra.mxu0 0.0
    %140 = vmatpush.msra.mxu0 0.0
    %141 = vmatpush.msra.mxu0 %v115
    %142 = vmatpush.msra.mxu0 %v114
    %143 = vmatmul.f32.gmra.mxu0 %v122
    %v144 = vpop.f32.mrf.mxu0
    %v145 = vadd.f32 %v118, %v144
    %146 = vmatmul.f32.gmra.mxu0 %v125
    %v147 = vpop.f32.mrf.mxu0
    %v148 = vadd.f32 %v118, %v147
    %149 = vdwg.mxu0
    %v150 = vld [vmem:[#allocation8] sm:$0xff]
    %v151 = vld [vmem:[#allocation8 + $0x8] sm:$0xff]
    %v152 = vld [vmem:[#allocation8 + $0x10] sm:$0xff]
    %v153 = vld [vmem:[%s5] sm:$0x1]
    %v155 = vperm.slane %v153, 0
    %vm157 = vcmask 195584
    %v159 = vsel %vm157, %v110, 0
    %v162 = vsel %vm157, %v111, 0
    %v165 = vsel %vm157, %v112, 0
    %v168 = vsel %vm157, %v113, 0
    %170 = vmatpush.msra.mxu0 0.0
    %171 = vmatpush.msra.mxu0 0.0
    %172 = vmatpush.msra.mxu0 0.0
    %173 = vmatpush.msra.mxu0 0.0
    %174 = vmatpush.msra.mxu0 0.0
    %175 = vmatpush.msra.mxu0 0.0
    %176 = vmatpush.msra.mxu0 0.0
    %177 = vmatpush.msra.mxu0 0.0
    %178 = vmatpush.msra.mxu0 0.0
    %179 = vmatpush.msra.mxu0 0.0
    %180 = vmatpush.msra.mxu0 0.0
    %181 = vmatpush.msra.mxu0 0.0
    %182 = vmatpush.msra.mxu0 0.0
    %183 = vmatpush.msra.mxu0 %v152
    %184 = vmatpush.msra.mxu0 %v151
    %185 = vmatpush.msra.mxu0 %v150
    %186 = vmatmul.f32.gmra.mxu0 %v159
    %v187 = vpop.f32.mrf.mxu0
    %v188 = vadd.f32 %v155, %v187
    %189 = vmatmul.f32.gmra.mxu0 %v162
    %v190 = vpop.f32.mrf.mxu0
    %v191 = vadd.f32 %v155, %v190
    %192 = vmatmul.f32.gmra.mxu0 %v165
    %v193 = vpop.f32.mrf.mxu0
    %v194 = vadd.f32 %v155, %v193
    %195 = vmatmul.f32.gmra.mxu0 %v168
    %v196 = vpop.f32.mrf.mxu0
    %v197 = vadd.f32 %v155, %v196
    %198 = vdwg.mxu0
    %v199 = vlaneseq
    %v200 = vand.u32 %v199, 127
    %vm201 = vcmp.lt.s32.totalorder %v200, 12
    %v202 = vsel %vm201, 0.0, -1e+30
    %v203 = vmul.f32 %v145, 0.17677669
    %v204 = vmul.f32 %v148, 0.17677669
    %vm205 = vcmask 64512
    %v207 = vsel %vm205, %v203, 0
    %v210 = vsel %vm205, %v188, 0
    %v213 = vsel %vm205, %v191, 0
    %215 = vmatpush.xpose.msra.mxu0 0.0
    %216 = vmatpush.xpose.msra.mxu0 0.0
    %217 = vmatpush.xpose.msra.mxu0 0.0
    %218 = vmatpush.xpose.msra.mxu0 0.0
    %219 = vmatpush.xpose.msra.mxu0 0.0
    %220 = vmatpush.xpose.msra.mxu0 0.0
    %221 = vmatpush.xpose.msra.mxu0 0.0
    %222 = vmatpush.xpose.msra.mxu0 0.0
    %223 = vmatpush.xpose.msra.mxu0 0.0
    %224 = vmatpush.xpose.msra.mxu0 0.0
    %225 = vmatpush.xpose.msra.mxu0 0.0
    %226 = vmatpush.xpose.msra.mxu0 0.0
    %227 = vmatpush.xpose.msra.mxu0 0.0
    %228 = vmatpush.xpose.msra.mxu0 0.0
    %229 = vmatpush.xpose.msra.mxu0 %v213
    %230 = vmatpush.xpose.msra.mxu0 %v210
    %231 = vmatmul.f32.gmra.mxu0 %v207
    %v232 = vpop.f32.mrf.mxu0
    %v233 = vadd.f32 %v202, %v232
    %234 = vdwg.mxu0
    %v236 = vsel %vm205, %v204, 0
    %v239 = vsel %vm205, %v194, 0
    %v242 = vsel %vm205, %v197, 0
    %244 = vmatpush.xpose.msra.mxu0 0.0
    %245 = vmatpush.xpose.msra.mxu0 0.0
    %246 = vmatpush.xpose.msra.mxu0 0.0
    %247 = vmatpush.xpose.msra.mxu0 0.0
    %248 = vmatpush.xpose.msra.mxu0 0.0
    %249 = vmatpush.xpose.msra.mxu0 0.0
    %250 = vmatpush.xpose.msra.mxu0 0.0
    %251 = vmatpush.xpose.msra.mxu0 0.0
    %252 = vmatpush.xpose.msra.mxu0 0.0
    %253 = vmatpush.xpose.msra.mxu0 0.0
    %254 = vmatpush.xpose.msra.mxu0 0.0
    %255 = vmatpush.xpose.msra.mxu0 0.0
    %256 = vmatpush.xpose.msra.mxu0 0.0
    %257 = vmatpush.xpose.msra.mxu0 0.0
    %258 = vmatpush.xpose.msra.mxu0 %v242
    %259 = vmatpush.xpose.msra.mxu0 %v239
    %260 = vmatmul.f32.gmra.mxu0 %v236
    %v261 = vpop.f32.mrf.mxu0
    %v262 = vadd.f32 %v202, %v261
    %263 = vdwg.mxu0
    %v264 = vsel %vm120, %v233, -inf
    %265 = vmax.xlane.f32.xlu0 %v264
    %v266 = vpop.xlane.xlu0 %265
    %v267 = vsel %vm120, %v262, -inf
    %268 = vmax.xlane.f32.xlu0 %v267
    %v269 = vpop.xlane.xlu0 %268
    %v270 = vsub.f32 %v233, %v266
    %v271 = vsub.f32 %v262, %v269
    %v272 = vmul.f32 %v270, 1.442695
    %v273 = vpow.pop %v272
    %v274 = vmul.f32 %v271, 1.442695
    %v275 = vpow.pop %v274
    %v276 = vsel %vm120, %v273, 0.0
    %277 = vadd.xlane.f32.xlu0 %v276
    %v278 = vpop.xlane.xlu0 %277
    %v279 = vsel %vm120, %v275, 0.0
    %280 = vadd.xlane.f32.xlu0 %v279
    %v281 = vpop.xlane.xlu0 %280
    %v282 = vrcp.pop %v278
    %v283 = vrcp.pop %v281
    %v284 = vmul.f32 %v273, %v282
    %v285 = vmul.f32 %v275, %v283
    %286 = vrot.lane.b32.xlu0 %v188, 96
    %v287 = vpop.permute.xlu0 %286
    %288 = vrot.lane.b32.xlu0 %v191, 96
    %v289 = vpop.permute.xlu0 %288
    %v293 = vsel %vm120, %v284, 0
    %295 = vmatpush.msra.mxu0 0.0
    %296 = vmatpush.msra.mxu0 0.0
    %297 = vmatpush.msra.mxu0 0.0
    %298 = vmatpush.msra.mxu0 0.0
    %299 = vmatpush.msra.mxu0 0.0
    %300 = vmatpush.msra.mxu0 0.0
    %301 = vmatpush.msra.mxu0 0.0
    %302 = vmatpush.msra.mxu0 0.0
    %303 = vmatpush.msra.mxu0 0.0
    %304 = vmatpush.msra.mxu0 0.0
    %305 = vmatpush.msra.mxu0 0.0
    %306 = vmatpush.msra.mxu0 0.0
    %307 = vmatpush.msra.mxu0 0.0
    %308 = vmatpush.msra.mxu0 0.0
    %309 = vmatpush.msra.mxu0 %v289
    %310 = vmatpush.msra.mxu0 %v287
    %311 = vmatmul.f32.gmra.mxu0 %v293
    %v312 = vpop.f32.mrf.mxu0
    %v313 = vadd.f32 0.0, %v312
    %314 = vdwg.mxu0
    %315 = vrot.lane.b32.xlu0 %v194, 96
    %v316 = vpop.permute.xlu0 %315
    %317 = vrot.lane.b32.xlu0 %v197, 96
    %v318 = vpop.permute.xlu0 %317
    %v322 = vsel %vm120, %v285, 0
    %324 = vmatpush.msra.mxu0 0.0
    %325 = vmatpush.msra.mxu0 0.0
    %326 = vmatpush.msra.mxu0 0.0
    %327 = vmatpush.msra.mxu0 0.0
    %328 = vmatpush.msra.mxu0 0.0
    %329 = vmatpush.msra.mxu0 0.0
    %330 = vmatpush.msra.mxu0 0.0
    %331 = vmatpush.msra.mxu0 0.0
    %332 = vmatpush.msra.mxu0 0.0
    %333 = vmatpush.msra.mxu0 0.0
    %334 = vmatpush.msra.mxu0 0.0
    %335 = vmatpush.msra.mxu0 0.0
    %336 = vmatpush.msra.mxu0 0.0
    %337 = vmatpush.msra.mxu0 0.0
    %338 = vmatpush.msra.mxu0 %v318
    %339 = vmatpush.msra.mxu0 %v316
    %340 = vmatmul.f32.gmra.mxu0 %v322
    %v341 = vpop.f32.mrf.mxu0
    %v342 = vadd.f32 0.0, %v341
    %343 = vdwg.mxu0
    %v344 = vadd.f32 %v145, %v313
    %v345 = vadd.f32 %v148, %v342
    %346 = vrot.lane.b32.xlu0 %v203, 120
    %v347 = vpop.permute.xlu0 %346
    %348 = vrot.lane.b32.xlu0 %v188, 120
    %v349 = vpop.permute.xlu0 %348
    %350 = vrot.lane.b32.xlu0 %v191, 120
    %v351 = vpop.permute.xlu0 %350
    %v352 = vsel %vm205, %v347, 0
    %v354 = vsel %vm205, %v349, 0
    %v356 = vsel %vm205, %v351, 0
    %358 = vmatpush.xpose.msra.mxu0 0.0
    %359 = vmatpush.xpose.msra.mxu0 0.0
    %360 = vmatpush.xpose.msra.mxu0 0.0
    %361 = vmatpush.xpose.msra.mxu0 0.0
    %362 = vmatpush.xpose.msra.mxu0 0.0
    %363 = vmatpush.xpose.msra.mxu0 0.0
    %364 = vmatpush.xpose.msra.mxu0 0.0
    %365 = vmatpush.xpose.msra.mxu0 0.0
    %366 = vmatpush.xpose.msra.mxu0 0.0
    %367 = vmatpush.xpose.msra.mxu0 0.0
    %368 = vmatpush.xpose.msra.mxu0 0.0
    %369 = vmatpush.xpose.msra.mxu0 0.0
    %370 = vmatpush.xpose.msra.mxu0 0.0
    %371 = vmatpush.xpose.msra.mxu0 0.0
    %372 = vmatpush.xpose.msra.mxu0 %v356
    %373 = vmatpush.xpose.msra.mxu0 %v354
    %374 = vmatmul.f32.gmra.mxu0 %v352
    %v375 = vpop.f32.mrf.mxu0
    %v376 = vadd.f32 %v202, %v375
    %377 = vdwg.mxu0
    %378 = vrot.lane.b32.xlu0 %v204, 120
    %v379 = vpop.permute.xlu0 %378
    %380 = vrot.lane.b32.xlu0 %v194, 120
    %v381 = vpop.permute.xlu0 %380
    %382 = vrot.lane.b32.xlu0 %v197, 120
    %v383 = vpop.permute.xlu0 %382
    %v384 = vsel %vm205, %v379, 0
    %v386 = vsel %vm205, %v381, 0
    %v388 = vsel %vm205, %v383, 0
    %390 = vmatpush.xpose.msra.mxu0 0.0
    %391 = vmatpush.xpose.msra.mxu0 0.0
    %392 = vmatpush.xpose.msra.mxu0 0.0
    %393 = vmatpush.xpose.msra.mxu0 0.0
    %394 = vmatpush.xpose.msra.mxu0 0.0
    %395 = vmatpush.xpose.msra.mxu0 0.0
    %396 = vmatpush.xpose.msra.mxu0 0.0
    %397 = vmatpush.xpose.msra.mxu0 0.0
    %398 = vmatpush.xpose.msra.mxu0 0.0
    %399 = vmatpush.xpose.msra.mxu0 0.0
    %400 = vmatpush.xpose.msra.mxu0 0.0
    %401 = vmatpush.xpose.msra.mxu0 0.0
    %402 = vmatpush.xpose.msra.mxu0 0.0
    %403 = vmatpush.xpose.msra.mxu0 0.0
    %404 = vmatpush.xpose.msra.mxu0 %v388
    %405 = vmatpush.xpose.msra.mxu0 %v386
    %406 = vmatmul.f32.gmra.mxu0 %v384
    %v407 = vpop.f32.mrf.mxu0
    %v408 = vadd.f32 %v202, %v407
    %409 = vdwg.mxu0
    %v410 = vsel %vm120, %v376, -inf
    %411 = vmax.xlane.f32.xlu0 %v410
    %v412 = vpop.xlane.xlu0 %411
    %v413 = vsel %vm120, %v408, -inf
    %414 = vmax.xlane.f32.xlu0 %v413
    %v415 = vpop.xlane.xlu0 %414
    %v416 = vsub.f32 %v376, %v412
    %v417 = vsub.f32 %v408, %v415
    %v418 = vmul.f32 %v416, 1.442695
    %v419 = vpow.pop %v418
    %v420 = vmul.f32 %v417, 1.442695
    %v421 = vpow.pop %v420
    %v422 = vsel %vm120, %v419, 0.0
    %423 = vadd.xlane.f32.xlu0 %v422
    %v424 = vpop.xlane.xlu0 %423
    %v425 = vsel %vm120, %v421, 0.0
    %426 = vadd.xlane.f32.xlu0 %v425
    %v427 = vpop.xlane.xlu0 %426
    %v428 = vrcp.pop %v424
    %v429 = vrcp.pop %v427
    %v430 = vmul.f32 %v419, %v428
    %v431 = vmul.f32 %v421, %v429
    %432 = vrot.lane.b32.xlu0 %v188, 88
    %v433 = vpop.permute.xlu0 %432
    %434 = vrot.lane.b32.xlu0 %v191, 88
    %v435 = vpop.permute.xlu0 %434
    %v439 = vsel %vm120, %v430, 0
    %441 = vmatpush.msra.mxu0 0.0
    %442 = vmatpush.msra.mxu0 0.0
    %443 = vmatpush.msra.mxu0 0.0
    %444 = vmatpush.msra.mxu0 0.0
    %445 = vmatpush.msra.mxu0 0.0
    %446 = vmatpush.msra.mxu0 0.0
    %447 = vmatpush.msra.mxu0 0.0
    %448 = vmatpush.msra.mxu0 0.0
    %449 = vmatpush.msra.mxu0 0.0
    %450 = vmatpush.msra.mxu0 0.0
    %451 = vmatpush.msra.mxu0 0.0
    %452 = vmatpush.msra.mxu0 0.0
    %453 = vmatpush.msra.mxu0 0.0
    %454 = vmatpush.msra.mxu0 0.0
    %455 = vmatpush.msra.mxu0 %v435
    %456 = vmatpush.msra.mxu0 %v433
    %457 = vmatmul.f32.gmra.mxu0 %v439
    %v458 = vpop.f32.mrf.mxu0
    %v459 = vadd.f32 0.0, %v458
    %460 = vdwg.mxu0
    %461 = vrot.lane.b32.xlu0 %v194, 88
    %v462 = vpop.permute.xlu0 %461
    %463 = vrot.lane.b32.xlu0 %v197, 88
    %v464 = vpop.permute.xlu0 %463
    %v468 = vsel %vm120, %v431, 0
    %470 = vmatpush.msra.mxu0 0.0
    %471 = vmatpush.msra.mxu0 0.0
    %472 = vmatpush.msra.mxu0 0.0
    %473 = vmatpush.msra.mxu0 0.0
    %474 = vmatpush.msra.mxu0 0.0
    %475 = vmatpush.msra.mxu0 0.0
    %476 = vmatpush.msra.mxu0 0.0
    %477 = vmatpush.msra.mxu0 0.0
    %478 = vmatpush.msra.mxu0 0.0
    %479 = vmatpush.msra.mxu0 0.0
    %480 = vmatpush.msra.mxu0 0.0
    %481 = vmatpush.msra.mxu0 0.0
    %482 = vmatpush.msra.mxu0 0.0
    %483 = vmatpush.msra.mxu0 0.0
    %484 = vmatpush.msra.mxu0 %v464
    %485 = vmatpush.msra.mxu0 %v462
    %486 = vmatmul.f32.gmra.mxu0 %v468
    %v487 = vpop.f32.mrf.mxu0
    %v488 = vadd.f32 0.0, %v487
    %489 = vdwg.mxu0
    %492 = vrot.lane.b32.xlu0 %v459, 8
    %v493 = vpop.permute.xlu0 %492
    %494 = vrot.lane.b32.xlu0 %v488, 8
    %v495 = vpop.permute.xlu0 %494
    %v498 = vadd.f32 %v145, %v493
    %v499 = vadd.f32 %v148, %v495
    %500 = vrot.lane.b32.xlu0 %v203, 112
    %v501 = vpop.permute.xlu0 %500
    %502 = vrot.lane.b32.xlu0 %v188, 112
    %v503 = vpop.permute.xlu0 %502
    %504 = vrot.lane.b32.xlu0 %v191, 112
    %v505 = vpop.permute.xlu0 %504
    %v506 = vsel %vm205, %v501, 0
    %v508 = vsel %vm205, %v503, 0
    %v510 = vsel %vm205, %v505, 0
    %512 = vmatpush.xpose.msra.mxu0 0.0
    %513 = vmatpush.xpose.msra.mxu0 0.0
    %514 = vmatpush.xpose.msra.mxu0 0.0
    %515 = vmatpush.xpose.msra.mxu0 0.0
    %516 = vmatpush.xpose.msra.mxu0 0.0
    %517 = vmatpush.xpose.msra.mxu0 0.0
    %518 = vmatpush.xpose.msra.mxu0 0.0
    %519 = vmatpush.xpose.msra.mxu0 0.0
    %520 = vmatpush.xpose.msra.mxu0 0.0
    %521 = vmatpush.xpose.msra.mxu0 0.0
    %522 = vmatpush.xpose.msra.mxu0 0.0
    %523 = vmatpush.xpose.msra.mxu0 0.0
    %524 = vmatpush.xpose.msra.mxu0 0.0
    %525 = vmatpush.xpose.msra.mxu0 0.0
    %526 = vmatpush.xpose.msra.mxu0 %v510
    %527 = vmatpush.xpose.msra.mxu0 %v508
    %528 = vmatmul.f32.gmra.mxu0 %v506
    %v529 = vpop.f32.mrf.mxu0
    %v530 = vadd.f32 %v202, %v529
    %531 = vdwg.mxu0
    %532 = vrot.lane.b32.xlu0 %v204, 112
    %v533 = vpop.permute.xlu0 %532
    %534 = vrot.lane.b32.xlu0 %v194, 112
    %v535 = vpop.permute.xlu0 %534
    %536 = vrot.lane.b32.xlu0 %v197, 112
    %v537 = vpop.permute.xlu0 %536
    %v538 = vsel %vm205, %v533, 0
    %v540 = vsel %vm205, %v535, 0
    %v542 = vsel %vm205, %v537, 0
    %544 = vmatpush.xpose.msra.mxu0 0.0
    %545 = vmatpush.xpose.msra.mxu0 0.0
    %546 = vmatpush.xpose.msra.mxu0 0.0
    %547 = vmatpush.xpose.msra.mxu0 0.0
    %548 = vmatpush.xpose.msra.mxu0 0.0
    %549 = vmatpush.xpose.msra.mxu0 0.0
    %550 = vmatpush.xpose.msra.mxu0 0.0
    %551 = vmatpush.xpose.msra.mxu0 0.0
    %552 = vmatpush.xpose.msra.mxu0 0.0
    %553 = vmatpush.xpose.msra.mxu0 0.0
    %554 = vmatpush.xpose.msra.mxu0 0.0
    %555 = vmatpush.xpose.msra.mxu0 0.0
    %556 = vmatpush.xpose.msra.mxu0 0.0
    %557 = vmatpush.xpose.msra.mxu0 0.0
    %558 = vmatpush.xpose.msra.mxu0 %v542
    %559 = vmatpush.xpose.msra.mxu0 %v540
    %560 = vmatmul.f32.gmra.mxu0 %v538
    %v561 = vpop.f32.mrf.mxu0
    %v562 = vadd.f32 %v202, %v561
    %563 = vdwg.mxu0
    %v564 = vsel %vm120, %v530, -inf
    %565 = vmax.xlane.f32.xlu0 %v564
    %v566 = vpop.xlane.xlu0 %565
    %v567 = vsel %vm120, %v562, -inf
    %568 = vmax.xlane.f32.xlu0 %v567
    %v569 = vpop.xlane.xlu0 %568
    %v570 = vsub.f32 %v530, %v566
    %v571 = vsub.f32 %v562, %v569
    %v572 = vmul.f32 %v570, 1.442695
    %v573 = vpow.pop %v572
    %v574 = vmul.f32 %v571, 1.442695
    %v575 = vpow.pop %v574
    %v576 = vsel %vm120, %v573, 0.0
    %577 = vadd.xlane.f32.xlu0 %v576
    %v578 = vpop.xlane.xlu0 %577
    %v579 = vsel %vm120, %v575, 0.0
    %580 = vadd.xlane.f32.xlu0 %v579
    %v581 = vpop.xlane.xlu0 %580
    %v582 = vrcp.pop %v578
    %v583 = vrcp.pop %v581
    %v584 = vmul.f32 %v573, %v582
    %v585 = vmul.f32 %v575, %v583
    %586 = vrot.lane.b32.xlu0 %v188, 80
    %v587 = vpop.permute.xlu0 %586
    %588 = vrot.lane.b32.xlu0 %v191, 80
    %v589 = vpop.permute.xlu0 %588
    %v593 = vsel %vm120, %v584, 0
    %595 = vmatpush.msra.mxu0 0.0
    %596 = vmatpush.msra.mxu0 0.0
    %597 = vmatpush.msra.mxu0 0.0
    %598 = vmatpush.msra.mxu0 0.0
    %599 = vmatpush.msra.mxu0 0.0
    %600 = vmatpush.msra.mxu0 0.0
    %601 = vmatpush.msra.mxu0 0.0
    %602 = vmatpush.msra.mxu0 0.0
    %603 = vmatpush.msra.mxu0 0.0
    %604 = vmatpush.msra.mxu0 0.0
    %605 = vmatpush.msra.mxu0 0.0
    %606 = vmatpush.msra.mxu0 0.0
    %607 = vmatpush.msra.mxu0 0.0
    %608 = vmatpush.msra.mxu0 0.0
    %609 = vmatpush.msra.mxu0 %v589
    %610 = vmatpush.msra.mxu0 %v587
    %611 = vmatmul.f32.gmra.mxu0 %v593
    %v612 = vpop.f32.mrf.mxu0
    %v613 = vadd.f32 0.0, %v612
    %614 = vdwg.mxu0
    %615 = vrot.lane.b32.xlu0 %v194, 80
    %v616 = vpop.permute.xlu0 %615
    %617 = vrot.lane.b32.xlu0 %v197, 80
    %v618 = vpop.permute.xlu0 %617
    %v622 = vsel %vm120, %v585, 0
    %624 = vmatpush.msra.mxu0 0.0
    %625 = vmatpush.msra.mxu0 0.0
    %626 = vmatpush.msra.mxu0 0.0
    %627 = vmatpush.msra.mxu0 0.0
    %628 = vmatpush.msra.mxu0 0.0
    %629 = vmatpush.msra.mxu0 0.0
    %630 = vmatpush.msra.mxu0 0.0
    %631 = vmatpush.msra.mxu0 0.0
    %632 = vmatpush.msra.mxu0 0.0
    %633 = vmatpush.msra.mxu0 0.0
    %634 = vmatpush.msra.mxu0 0.0
    %635 = vmatpush.msra.mxu0 0.0
    %636 = vmatpush.msra.mxu0 0.0
    %637 = vmatpush.msra.mxu0 0.0
    %638 = vmatpush.msra.mxu0 %v618
    %639 = vmatpush.msra.mxu0 %v616
    %640 = vmatmul.f32.gmra.mxu0 %v622
    %v641 = vpop.f32.mrf.mxu0
    %v642 = vadd.f32 0.0, %v641
    %643 = vdwg.mxu0
    %646 = vrot.lane.b32.xlu0 %v613, 16
    %v647 = vpop.permute.xlu0 %646
    %648 = vrot.lane.b32.xlu0 %v642, 16
    %v649 = vpop.permute.xlu0 %648
    %v652 = vadd.f32 %v145, %v647
    %v653 = vadd.f32 %v148, %v649
    %654 = vrot.lane.b32.xlu0 %v203, 104
    %v655 = vpop.permute.xlu0 %654
    %656 = vrot.lane.b32.xlu0 %v188, 104
    %v657 = vpop.permute.xlu0 %656
    %658 = vrot.lane.b32.xlu0 %v191, 104
    %v659 = vpop.permute.xlu0 %658
    %v660 = vsel %vm205, %v655, 0
    %v662 = vsel %vm205, %v657, 0
    %v664 = vsel %vm205, %v659, 0
    %666 = vmatpush.xpose.msra.mxu0 0.0
    %667 = vmatpush.xpose.msra.mxu0 0.0
    %668 = vmatpush.xpose.msra.mxu0 0.0
    %669 = vmatpush.xpose.msra.mxu0 0.0
    %670 = vmatpush.xpose.msra.mxu0 0.0
    %671 = vmatpush.xpose.msra.mxu0 0.0
    %672 = vmatpush.xpose.msra.mxu0 0.0
    %673 = vmatpush.xpose.msra.mxu0 0.0
    %674 = vmatpush.xpose.msra.mxu0 0.0
    %675 = vmatpush.xpose.msra.mxu0 0.0
    %676 = vmatpush.xpose.msra.mxu0 0.0
    %677 = vmatpush.xpose.msra.mxu0 0.0
    %678 = vmatpush.xpose.msra.mxu0 0.0
    %679 = vmatpush.xpose.msra.mxu0 0.0
    %680 = vmatpush.xpose.msra.mxu0 %v664
    %681 = vmatpush.xpose.msra.mxu0 %v662
    %682 = vmatmul.f32.gmra.mxu0 %v660
    %v683 = vpop.f32.mrf.mxu0
    %v684 = vadd.f32 %v202, %v683
    %685 = vdwg.mxu0
    %686 = vrot.lane.b32.xlu0 %v204, 104
    %v687 = vpop.permute.xlu0 %686
    %688 = vrot.lane.b32.xlu0 %v194, 104
    %v689 = vpop.permute.xlu0 %688
    %690 = vrot.lane.b32.xlu0 %v197, 104
    %v691 = vpop.permute.xlu0 %690
    %v692 = vsel %vm205, %v687, 0
    %v694 = vsel %vm205, %v689, 0
    %v696 = vsel %vm205, %v691, 0
    %698 = vmatpush.xpose.msra.mxu0 0.0
    %699 = vmatpush.xpose.msra.mxu0 0.0
    %700 = vmatpush.xpose.msra.mxu0 0.0
    %701 = vmatpush.xpose.msra.mxu0 0.0
    %702 = vmatpush.xpose.msra.mxu0 0.0
    %703 = vmatpush.xpose.msra.mxu0 0.0
    %704 = vmatpush.xpose.msra.mxu0 0.0
    %705 = vmatpush.xpose.msra.mxu0 0.0
    %706 = vmatpush.xpose.msra.mxu0 0.0
    %707 = vmatpush.xpose.msra.mxu0 0.0
    %708 = vmatpush.xpose.msra.mxu0 0.0
    %709 = vmatpush.xpose.msra.mxu0 0.0
    %710 = vmatpush.xpose.msra.mxu0 0.0
    %711 = vmatpush.xpose.msra.mxu0 0.0
    %712 = vmatpush.xpose.msra.mxu0 %v696
    %713 = vmatpush.xpose.msra.mxu0 %v694
    %714 = vmatmul.f32.gmra.mxu0 %v692
    %v715 = vpop.f32.mrf.mxu0
    %v716 = vadd.f32 %v202, %v715
    %717 = vdwg.mxu0
    %v718 = vsel %vm120, %v684, -inf
    %719 = vmax.xlane.f32.xlu0 %v718
    %v720 = vpop.xlane.xlu0 %719
    %v721 = vsel %vm120, %v716, -inf
    %722 = vmax.xlane.f32.xlu0 %v721
    %v723 = vpop.xlane.xlu0 %722
    %v724 = vsub.f32 %v684, %v720
    %v725 = vsub.f32 %v716, %v723
    %v726 = vmul.f32 %v724, 1.442695
    %v727 = vpow.pop %v726
    %v728 = vmul.f32 %v725, 1.442695
    %v729 = vpow.pop %v728
    %v730 = vsel %vm120, %v727, 0.0
    %731 = vadd.xlane.f32.xlu0 %v730
    %v732 = vpop.xlane.xlu0 %731
    %v733 = vsel %vm120, %v729, 0.0
    %734 = vadd.xlane.f32.xlu0 %v733
    %v735 = vpop.xlane.xlu0 %734
    %v736 = vrcp.pop %v732
    %v737 = vrcp.pop %v735
    %v738 = vmul.f32 %v727, %v736
    %v739 = vmul.f32 %v729, %v737
    %740 = vrot.lane.b32.xlu0 %v188, 72
    %v741 = vpop.permute.xlu0 %740
    %742 = vrot.lane.b32.xlu0 %v191, 72
    %v743 = vpop.permute.xlu0 %742
    %v747 = vsel %vm120, %v738, 0
    %749 = vmatpush.msra.mxu0 0.0
    %750 = vmatpush.msra.mxu0 0.0
    %751 = vmatpush.msra.mxu0 0.0
    %752 = vmatpush.msra.mxu0 0.0
    %753 = vmatpush.msra.mxu0 0.0
    %754 = vmatpush.msra.mxu0 0.0
    %755 = vmatpush.msra.mxu0 0.0
    %756 = vmatpush.msra.mxu0 0.0
    %757 = vmatpush.msra.mxu0 0.0
    %758 = vmatpush.msra.mxu0 0.0
    %759 = vmatpush.msra.mxu0 0.0
    %760 = vmatpush.msra.mxu0 0.0
    %761 = vmatpush.msra.mxu0 0.0
    %762 = vmatpush.msra.mxu0 0.0
    %763 = vmatpush.msra.mxu0 %v743
    %764 = vmatpush.msra.mxu0 %v741
    %765 = vmatmul.f32.gmra.mxu0 %v747
    %v766 = vpop.f32.mrf.mxu0
    %v767 = vadd.f32 0.0, %v766
    %768 = vdwg.mxu0
    %769 = vrot.lane.b32.xlu0 %v194, 72
    %v770 = vpop.permute.xlu0 %769
    %771 = vrot.lane.b32.xlu0 %v197, 72
    %v772 = vpop.permute.xlu0 %771
    %v776 = vsel %vm120, %v739, 0
    %778 = vmatpush.msra.mxu0 0.0
    %779 = vmatpush.msra.mxu0 0.0
    %780 = vmatpush.msra.mxu0 0.0
    %781 = vmatpush.msra.mxu0 0.0
    %782 = vmatpush.msra.mxu0 0.0
    %783 = vmatpush.msra.mxu0 0.0
    %784 = vmatpush.msra.mxu0 0.0
    %785 = vmatpush.msra.mxu0 0.0
    %786 = vmatpush.msra.mxu0 0.0
    %787 = vmatpush.msra.mxu0 0.0
    %788 = vmatpush.msra.mxu0 0.0
    %789 = vmatpush.msra.mxu0 0.0
    %790 = vmatpush.msra.mxu0 0.0
    %791 = vmatpush.msra.mxu0 0.0
    %792 = vmatpush.msra.mxu0 %v772
    %793 = vmatpush.msra.mxu0 %v770
    %794 = vmatmul.f32.gmra.mxu0 %v776
    %v795 = vpop.f32.mrf.mxu0
    %v796 = vadd.f32 0.0, %v795
    %797 = vdwg.mxu0
    %800 = vrot.lane.b32.xlu0 %v767, 24
    %v801 = vpop.permute.xlu0 %800
    %802 = vrot.lane.b32.xlu0 %v796, 24
    %v803 = vpop.permute.xlu0 %802
    %v806 = vadd.f32 %v145, %v801
    %v807 = vadd.f32 %v148, %v803
    %v808 = vsel %vm205, %v344, %v498
    %v809 = vsel %vm205, %v345, %v499
    %v810 = vsel %vm120, %v808, %v652
    %v811 = vsel %vm120, %v809, %v653
    %v812 = vsel %vm157, %v810, %v806
    %v813 = vsel %vm157, %v811, %v807
    %v814 = vld [vmem:[#allocation10] sm:$0xff]
    %v815 = vld [vmem:[#allocation10 + $0x8] sm:$0xff]
    %v816 = vld [vmem:[#allocation10 + $0x10] sm:$0xff]
    %v817 = vld [vmem:[#allocation10 + $0x18] sm:$0xff]
    %v818 = vld [vmem:[%s7] sm:$0x1]
    %v820 = vperm.slane %v818, 0
    %vm822 = vcmask 261120
    %v824 = vsel %vm822, %v812, 0
    %v827 = vsel %vm822, %v813, 0
    %829 = vmatpush.msra.mxu0 0.0
    %830 = vmatpush.msra.mxu0 0.0
    %831 = vmatpush.msra.mxu0 0.0
    %832 = vmatpush.msra.mxu0 0.0
    %833 = vmatpush.msra.mxu0 0.0
    %834 = vmatpush.msra.mxu0 0.0
    %835 = vmatpush.msra.mxu0 0.0
    %836 = vmatpush.msra.mxu0 0.0
    %837 = vmatpush.msra.mxu0 0.0
    %838 = vmatpush.msra.mxu0 0.0
    %839 = vmatpush.msra.mxu0 0.0
    %840 = vmatpush.msra.mxu0 0.0
    %841 = vmatpush.msra.mxu0 %v817
    %842 = vmatpush.msra.mxu0 %v816
    %843 = vmatpush.msra.mxu0 %v815
    %844 = vmatpush.msra.mxu0 %v814
    %845 = vmatmul.f32.gmra.mxu0 %v824
    %v846 = vpop.f32.mrf.mxu0
    %v847 = vadd.f32 %v820, %v846
    %848 = vmatmul.f32.gmra.mxu0 %v827
    %v849 = vpop.f32.mrf.mxu0
    %v850 = vadd.f32 %v820, %v849
    %851 = vdwg.mxu0
    %v852 = vmax.f32 %v847, 0.0
    %v853 = vmax.f32 %v850, 0.0
    %v854 = vadd.f32 %v812, %v852
    %v855 = vadd.f32 %v813, %v853
    %856 = vst.msk [vmem:[#allocation11] sm:$0xff] %vm822, %v854
    %857 = vst.msk [vmem:[#allocation11 + $0x8] sm:$0xff] %vm822, %v855
    // Predicated region
    $region54: #{tpu_custom_call.1} parent=1 // pred_check
      _
    $region55: #{tpu_custom_call.1} parent=1 // pred_check_branch
      %859 = sbr.rel (0) target = $region57
    $region56: #{tpu_custom_call.1} parent=1 // pred_region
      %861 = vsyncadd [#allocation4], 0
      %s862 = sshll.u32 [#allocation11], 4
      %s863 = int_to_ptr.vmem [resolvable:$true] %s862
      %s864 = sshll.u32 %s8, 4
      %s865 = int_to_ptr.hbm [resolvable:$true] %s864
      %870 = dma.vmem_to_hbm [thread:$0]  %s863, 256, %s865, [#allocation4], 128, 128, 8
    $region57: #{tpu_custom_call.1} parent=1 // pred_fallthru
      _
    // Predicated region
    $region58: #{tpu_custom_call.1} parent=1 // pred_check
      _
    $region59: #{tpu_custom_call.1} parent=1 // pred_check_branch
      %872 = sbr.rel (0) target = $region61
    $region60: #{tpu_custom_call.1} parent=1 // pred_region
      %874 = dma.done [#allocation4], 256
    $region61: #{tpu_custom_call.1} parent=1 // pred_fallthru
      _
    %875 = vsyncpa [#allocation3], 1
    %876 = vsyncpa [#allocation6], 1
    %877 = vsyncpa [#allocation9], 1
    %878 = vsyncpa [#allocation4], 1

</llo_original>
